<compile_context>
chip_gen: v5e
topology: v5e:2x2
jax: 0.10.0
libtpu: 0.0.40
codegen_flags: <defaults>
</compile_context>

<pallas_src>
import jax
import jax.numpy as jnp
from jax import lax
from jax.experimental import pallas as pl
from jax.experimental.pallas import tpu as pltpu


def _round_up(x, m):
    return (x + m - 1) // m * m


def _linear_kernel(x_ref, w_ref, b_ref, o_ref):
    # x_ref: (TILE_M, Kp) f32   w_ref: (Np, Kp) bf16   b_ref: (1, Np) f32
    # o_ref: (TILE_M, Np) f32
    x = x_ref[...].astype(jnp.bfloat16)
    acc = lax.dot_general(
        x, w_ref[...],
        dimension_numbers=(((1,), (1,)), ((), ())),  # contract K of both operands
        preferred_element_type=jnp.float32,
    )
    o_ref[...] = (acc + b_ref[...]).astype(o_ref.dtype)


def decoder_forward(data, weight, bias, *, tile_m=512):
    """data: (..., latent_dim); weight: (input_dim, latent_dim) [PyTorch layout];
    bias: (input_dim,). Returns (..., input_dim) = data @ weight.T + bias."""
    *lead, k = data.shape
    n = weight.shape[0]

    x2d = data.reshape(-1, k)
    m = x2d.shape[0]

    # Lane-dense / MXU-friendly padding.
    kp = _round_up(k, 128)
    np_ = _round_up(n, 128)
    tm = _round_up(min(tile_m, m), 8)
    mp = _round_up(m, tm)

    x_pad = jnp.pad(x2d, ((0, mp - m), (0, kp - k)))
    w_pad = jnp.pad(weight, ((0, np_ - n), (0, kp - k))).astype(jnp.bfloat16)
    b_pad = jnp.pad(bias, (0, np_ - n)).reshape(1, np_).astype(jnp.float32)

    grid_m = mp // tm

    cost = pl.CostEstimate(
        flops=2 * mp * kp * np_,
        transcendentals=0,
        bytes_accessed=4 * mp * kp + 2 * kp * np_ + 4 * np_ + 4 * mp * np_,
    )

    out = pl.pallas_call(
        _linear_kernel,
        out_shape=jax.ShapeDtypeStruct((mp, np_), data.dtype),
        grid_spec=pltpu.PrefetchScalarGridSpec(
            num_scalar_prefetch=0,
            grid=(grid_m,),
            in_specs=[
                pl.BlockSpec((tm, kp), lambda i: (i, 0)),   # activations: tiled over M
                pl.BlockSpec((np_, kp), lambda i: (0, 0)),  # weight: VMEM-resident
                pl.BlockSpec((1, np_), lambda i: (0, 0)),   # bias: VMEM-resident
            ],
            out_specs=pl.BlockSpec((tm, np_), lambda i: (i, 0)),
        ),
        compiler_params=pltpu.CompilerParams(
            dimension_semantics=("parallel",),        # independent M tiles (v7x 2 TCs)
            vmem_limit_bytes=32 * 1024 * 1024,        # > v5e 16 MiB default, < v7x 64 MiB
        ),
        cost_estimate=cost,
    )(x_pad, w_pad, b_pad)

    return out[:m, :n].reshape(*lead, n)


def init_decoder_params(key, latent_dim, input_dim):
    # utils.init_network_weights: normal(mean=0, std=0.1) for weight, zeros for bias
    wkey, _ = jax.random.split(key)
    weight = 0.1 * jax.random.normal(wkey, (input_dim, latent_dim), dtype=jnp.float32)
    bias = jnp.zeros((input_dim,), dtype=jnp.float32)
    return weight, bias


if __name__ == "__main__":
    latent_dim, input_dim = 32, 16
    batch, seq = 2, 8

    key = jax.random.PRNGKey(0)
    kdata, kparams = jax.random.split(key)
    data = jax.random.normal(kdata, (batch, seq, latent_dim), dtype=jnp.float32)
    weight, bias = init_decoder_params(kparams, latent_dim, input_dim)

    out = decoder_forward(data, weight, bias)
    jax.block_until_ready(out)

    # sanity check against plain-JAX reference (bf16 MXU operands -> looser tolerance)
    ref = data @ weight.T + bias
    assert out.shape == (batch, seq, input_dim)
    assert jnp.allclose(out, ref, atol=3e-2, rtol=3e-2), float(jnp.max(jnp.abs(out - ref)))
    print("KERNEL_OK")
</pallas_src>

<mosaic_0001>
module attributes {stable_mosaic.version = 11 : i64} {
  func.func @_linear_kernel(%arg0: i32, %arg1: memref<16x128xf32, #tpu.memory_space<vmem>>, %arg2: memref<128x128xbf16, #tpu.memory_space<vmem>>, %arg3: memref<1x128xf32, #tpu.memory_space<vmem>>, %arg4: memref<16x128xf32, #tpu.memory_space<vmem>>) attributes {dimension_semantics = [#tpu.dimension_semantics<parallel>], iteration_bounds = array<i64: 1>, scalar_prefetch = 0 : i64, scratch_operands = 0 : i64, tpu.core_type = #tpu.core_type<tc>, window_params = [{transform_indices = @transform_0, window_bounds = array<i64: 16, 128>}, {pipeline_mode = #tpu.pipeline_mode<synchronous>, transform_indices = @transform_1, window_bounds = array<i64: 128, 128>}, {pipeline_mode = #tpu.pipeline_mode<synchronous>, transform_indices = @transform_2, window_bounds = array<i64: 1, 128>}, {transform_indices = @transform_3, window_bounds = array<i64: 16, 128>}]} {
    %c0 = arith.constant 0 : index
    %c0_0 = arith.constant 0 : index
    %0 = vector.load %arg1[%c0, %c0_0] : memref<16x128xf32, #tpu.memory_space<vmem>>, vector<16x128xf32>
    %1 = arith.truncf %0 : vector<16x128xf32> to vector<16x128xbf16>
    %c0_1 = arith.constant 0 : index
    %c0_2 = arith.constant 0 : index
    %2 = vector.load %arg2[%c0_1, %c0_2] : memref<128x128xbf16, #tpu.memory_space<vmem>>, vector<128x128xbf16>
    %cst = arith.constant dense<0.000000e+00> : vector<16x128xf32>
    %3 = tpu.matmul %1, %2, %cst {dimension_numbers = #tpu.dot_dimension_numbers<[1], [1], [0], [0], [0, 0, 1, 0], [], []>} : vector<16x128xbf16>, vector<128x128xbf16>, vector<16x128xf32> -> vector<16x128xf32>
    %c0_3 = arith.constant 0 : index
    %c0_4 = arith.constant 0 : index
    %4 = vector.load %arg3[%c0_3, %c0_4] : memref<1x128xf32, #tpu.memory_space<vmem>>, vector<1x128xf32>
    %5 = vector.broadcast %4 : vector<1x128xf32> to vector<16x128xf32>
    %6 = arith.addf %3, %5 : vector<16x128xf32>
    %c0_5 = arith.constant 0 : index
    %c0_6 = arith.constant 0 : index
    %7 = vector.load %arg4[%c0_5, %c0_6] : memref<16x128xf32, #tpu.memory_space<vmem>>, vector<16x128xf32>
    tpu.vector_store %arg4[%c0_5, %c0_6], %6 {strides = array<i32>} : memref<16x128xf32, #tpu.memory_space<vmem>>, vector<16x128xf32>,
    return
  }
  func.func @transform_0(%arg0: i32) -> (i32, i32) {
    %c0_i32 = arith.constant 0 : i32
    %c0_i32_0 = arith.constant 0 : i32
    return %arg0, %c0_i32 : i32, i32
  }
  func.func @transform_1(%arg0: i32) -> (i32, i32) {
    %c0_i32 = arith.constant 0 : i32
    %c0_i32_0 = arith.constant 0 : i32
    %c0_i32_1 = arith.constant 0 : i32
    return %c0_i32, %c0_i32_0 : i32, i32
  }
  func.func @transform_2(%arg0: i32) -> (i32, i32) {
    %c0_i32 = arith.constant 0 : i32
    %c0_i32_0 = arith.constant 0 : i32
    %c0_i32_1 = arith.constant 0 : i32
    return %c0_i32, %c0_i32_0 : i32, i32
  }
  func.func @transform_3(%arg0: i32) -> (i32, i32) {
    %c0_i32 = arith.constant 0 : i32
    %c0_i32_0 = arith.constant 0 : i32
    return %arg0, %c0_i32 : i32, i32
  }
}

</mosaic_0001>

<llo_original>
// kernel: tpu_custom_call.1
$region0: #{tpu_custom_call.1}
  #allocation0 [shape = 'u32[]', space=smem, size = 0x4, offset = 0x4, fixed_abs, tag = 'smem constant byte address 0x4 - core index']
  #allocation1 [shape = 'u32[72,128]{1,0:T(1,128)}', space=vmem, size = 0x9000, scoped, tag = 'internal scratch']
  %s0 = inlined_call_operand.hbm [shape: f32[16,128], index: 0, kind: input, shape index: {}]
  %s1 = inlined_call_operand.hbm [shape: bf16[128,128], index: 1, kind: input, shape index: {}]
  %s2 = inlined_call_operand.vmem [shape: f32[1,128], index: 2, kind: input, shape index: {}]
  %s3 = inlined_call_operand.hbm [shape: f32[16,128], index: 3, kind: output, shape index: {}]
  %s4 = sld [smem:[#allocation0]]
  $region30: #{tpu_custom_call.1} parent=0
    _
  %s6 = ssub.s32 1, %s4
  %s7 = scalar_select 0, %s6, %s4
  $region1: #{tpu_custom_call.1} parent=0
    #allocation2 [shape = 'u8[8192]{0}', space=vmem, size = 0x2000, scoped, tag = 'input window, operand 0, single buffered']
    #allocation3 [shape = 's32[1]{0}', space=sflag, size = 0x4, scoped, tag = 'scoped memory for tpu_custom_call.1']
    #allocation4 [shape = 's32[1]{0}', space=sflag, size = 0x4, scoped, tag = 'scoped memory for tpu_custom_call.1']
    #allocation5 [shape = 'u8[32768]{0}', space=vmem, size = 0x8000, scoped, tag = 'input window, operand 1, single buffered']
    #allocation6 [shape = 's32[1]{0}', space=sflag, size = 0x4, scoped, tag = 'scoped memory for tpu_custom_call.1']
    #allocation7 [shape = 'u8[8192]{0}', space=vmem, size = 0x2000, scoped, tag = 'output window, operand 0, single buffered']
    %8 = vsyncpa [#allocation3], 0
    %9 = vsyncpa [#allocation6], 0
    %10 = vsyncpa [#allocation4], 0
    // Predicated region
    $region2: #{tpu_custom_call.1} parent=1 // pred_check
      _
    $region3: #{tpu_custom_call.1} parent=1 // pred_check_branch
      %12 = sbr.rel (0) target = $region5
    $region4: #{tpu_custom_call.1} parent=1 // pred_region
      %14 = vsyncadd [#allocation3], 0
      %s15 = sshll.u32 %s0, 4
      %s16 = int_to_ptr.hbm [resolvable:$true] %s15
      %s17 = sshll.u32 [#allocation2], 4
      %s18 = int_to_ptr.vmem [resolvable:$true] %s17
      %23 = dma.hbm_to_vmem [thread:$0]  %s16, 256, %s18, [#allocation3], 128, 128, 8
    $region5: #{tpu_custom_call.1} parent=1 // pred_fallthru
      _
    // Predicated region
    $region6: #{tpu_custom_call.1} parent=1 // pred_check
      _
    $region7: #{tpu_custom_call.1} parent=1 // pred_check_branch
      %25 = sbr.rel (0) target = $region9
    $region8: #{tpu_custom_call.1} parent=1 // pred_region
      %27 = vsyncadd [#allocation6], 0
      %s28 = sshll.u32 %s1, 4
      %s29 = int_to_ptr.hbm [resolvable:$true] %s28
      %s30 = sshll.u32 [#allocation5], 4
      %s31 = int_to_ptr.vmem [resolvable:$true] %s30
      %36 = dma.hbm_to_vmem [thread:$0]  %s29, 1024, %s31, [#allocation6], 64, 64, 4
    $region9: #{tpu_custom_call.1} parent=1 // pred_fallthru
      _
    // Predicated region
    $region10: #{tpu_custom_call.1} parent=1 // pred_check
      _
    $region11: #{tpu_custom_call.1} parent=1 // pred_check_branch
      %38 = sbr.rel (0) target = $region13
    $region12: #{tpu_custom_call.1} parent=1 // pred_region
      _
    $region13: #{tpu_custom_call.1} parent=1 // pred_fallthru
      _
    // Predicated region
    $region14: #{tpu_custom_call.1} parent=1 // pred_check
      _
    $region15: #{tpu_custom_call.1} parent=1 // pred_check_branch
      %40 = sbr.rel (0) target = $region17
    $region16: #{tpu_custom_call.1} parent=1 // pred_region
      %42 = dma.done [#allocation3], 256
    $region17: #{tpu_custom_call.1} parent=1 // pred_fallthru
      _
    // Predicated region
    $region18: #{tpu_custom_call.1} parent=1 // pred_check
      _
    $region19: #{tpu_custom_call.1} parent=1 // pred_check_branch
      %44 = sbr.rel (0) target = $region21
    $region20: #{tpu_custom_call.1} parent=1 // pred_region
      %46 = dma.done [#allocation6], 1024
    $region21: #{tpu_custom_call.1} parent=1 // pred_fallthru
      _
    %v47 = vld [vmem:[#allocation2] sm:$0xff]
    %v48 = vld [vmem:[#allocation2 + $0x8] sm:$0xff]
    %v49 = vpack.c.bf16 %v48, %v47
    %v50 = vld [vmem:[#allocation5] sm:$0xf]
    %v51 = vld [vmem:[#allocation5 + $0x4] sm:$0xf]
    %v52 = vld [vmem:[#allocation5 + $0x8] sm:$0xf]
    %v53 = vld [vmem:[#allocation5 + $0xc] sm:$0xf]
    %v54 = vld [vmem:[#allocation5 + $0x10] sm:$0xf]
    %v55 = vld [vmem:[#allocation5 + $0x14] sm:$0xf]
    %v56 = vld [vmem:[#allocation5 + $0x18] sm:$0xf]
    %v57 = vld [vmem:[#allocation5 + $0x1c] sm:$0xf]
    %v58 = vld [vmem:[#allocation5 + $0x20] sm:$0xf]
    %v59 = vld [vmem:[#allocation5 + $0x24] sm:$0xf]
    %v60 = vld [vmem:[#allocation5 + $0x28] sm:$0xf]
    %v61 = vld [vmem:[#allocation5 + $0x2c] sm:$0xf]
    %v62 = vld [vmem:[#allocation5 + $0x30] sm:$0xf]
    %v63 = vld [vmem:[#allocation5 + $0x34] sm:$0xf]
    %v64 = vld [vmem:[#allocation5 + $0x38] sm:$0xf]
    %v65 = vld [vmem:[#allocation5 + $0x3c] sm:$0xf]
    %v66 = vld [vmem:[%s2] sm:$0x1]
    %v68 = vperm.slane %v66, 0
    %v86 = vunpack.c.l.b16 %v50
    %v87 = vunpack.c.l.b16 %v51
    %v88 = vunpack.c.l.b16 %v52
    %v89 = vunpack.c.l.b16 %v53
    %v90 = vunpack.c.l.b16 %v54
    %v91 = vunpack.c.l.b16 %v55
    %v92 = vunpack.c.l.b16 %v56
    %v93 = vunpack.c.l.b16 %v57
    %v94 = vunpack.c.l.b16 %v58
    %v95 = vunpack.c.l.b16 %v59
    %v96 = vunpack.c.l.b16 %v60
    %v97 = vunpack.c.l.b16 %v61
    %v98 = vunpack.c.l.b16 %v62
    %v99 = vunpack.c.l.b16 %v63
    %v100 = vunpack.c.l.b16 %v64
    %v101 = vunpack.c.l.b16 %v65
    %v102 = vpack.c.b16 %v87, %v86
    %v103 = vpack.c.b16 %v89, %v88
    %v104 = vpack.c.b16 %v91, %v90
    %v105 = vpack.c.b16 %v93, %v92
    %v106 = vpack.c.b16 %v95, %v94
    %v107 = vpack.c.b16 %v97, %v96
    %v108 = vpack.c.b16 %v99, %v98
    %v109 = vpack.c.b16 %v101, %v100
    %118 = vmatpush.bf16.xpose.msra.mxu0 %v109
    %119 = vmatpush.bf16.xpose.msra.mxu0 %v108
    %120 = vmatpush.bf16.xpose.msra.mxu0 %v107
    %121 = vmatpush.bf16.xpose.msra.mxu0 %v106
    %122 = vmatpush.bf16.xpose.msra.mxu0 %v105
    %123 = vmatpush.bf16.xpose.msra.mxu0 %v104
    %124 = vmatpush.bf16.xpose.msra.mxu0 %v103
    %125 = vmatpush.bf16.xpose.msra.mxu0 %v102
    %126 = vmatmul.bf16.gmra.mxu0 %v49
    %v127 = vpop.f32.mrf.mxu0
    %v128 = vadd.f32 %v68, %v127
    %v129 = vpop.f32.mrf.mxu0
    %v130 = vadd.f32 %v68, %v129
    %131 = vdwg.mxu0
    %132 = vst [vmem:[#allocation7] sm:$0xff] %v128
    %133 = vst [vmem:[#allocation7 + $0x8] sm:$0xff] %v130
    // Predicated region
    $region22: #{tpu_custom_call.1} parent=1 // pred_check
      _
    $region23: #{tpu_custom_call.1} parent=1 // pred_check_branch
      %135 = sbr.rel (0) target = $region25
    $region24: #{tpu_custom_call.1} parent=1 // pred_region
      %137 = vsyncadd [#allocation4], 0
      %s138 = sshll.u32 [#allocation7], 4
      %s139 = int_to_ptr.vmem [resolvable:$true] %s138
      %s140 = sshll.u32 %s3, 4
      %s141 = int_to_ptr.hbm [resolvable:$true] %s140
      %146 = dma.vmem_to_hbm [thread:$0]  %s139, 256, %s141, [#allocation4], 128, 128, 8
    $region25: #{tpu_custom_call.1} parent=1 // pred_fallthru
      _
    // Predicated region
    $region26: #{tpu_custom_call.1} parent=1 // pred_check
      _
    $region27: #{tpu_custom_call.1} parent=1 // pred_check_branch
      %148 = sbr.rel (0) target = $region29
    $region28: #{tpu_custom_call.1} parent=1 // pred_region
      %150 = dma.done [#allocation4], 256
    $region29: #{tpu_custom_call.1} parent=1 // pred_fallthru
      _
    %151 = vsyncpa [#allocation3], 1
    %152 = vsyncpa [#allocation6], 1
    %153 = vsyncpa [#allocation4], 1

</llo_original>
